<compile_context>
chip_gen: v5e
topology: v5e:2x2
jax: 0.10.0
libtpu: 0.0.40
codegen_flags: <defaults>
</compile_context>

<pallas_src>
import jax
import jax.numpy as jnp
from jax import lax
from jax.experimental import pallas as pl
from jax.experimental.pallas import tpu as pltpu


def _round_up(x, m):
    return ((x + m - 1) // m) * m


def _vmem_capacity_bytes():
    # Trace-time hardware query; fall back to the smallest per-core VMEM
    # across generations (v7x: 64 MiB) if unavailable.
    try:
        return int(pltpu.get_tpu_info().vmem_capacity_bytes)
    except Exception:
        return 64 * 1024 * 1024


def noisy_linear_kernel(x_ref, wmu_ref, wsig_ref, weps_ref, b_ref, o_ref):
    k = pl.program_id(2)

    # Output tile (i, j) is resident across the whole K loop, so it doubles as
    # the f32 accumulator (no scratch, no final copy). Seed it with the
    # pre-combined bias on the first K step.
    @pl.when(k == 0)
    def _():
        o_ref[...] = jnp.zeros_like(o_ref) + b_ref[...]       # (1,tn)->(tm,tn)

    # Noisy weight for this (N, K) tile, fused on the VPU while the next
    # tiles' DMAs are in flight (kernel is HBM-bound on the weight streams).
    w = wmu_ref[...] + wsig_ref[...] * weps_ref[...]           # [tn, tk]

    # Contract the LAST dims of both operands (x:[tm,tk] . w:[tn,tk]) so no
    # weight transpose is materialized; feeds the MXU directly.
    o_ref[...] += lax.dot_general(
        x_ref[...], w,
        dimension_numbers=(((1,), (1,)), ((), ())),
        preferred_element_type=jnp.float32)


def noisy_linear(x, weight_mu, weight_sigma, weight_epsilon,
                 bias_mu, bias_sigma, bias_epsilon,
                 *, tm=None, tn=None, tk=None):
    """Training-mode NoisyLinear forward. x: [B, in], weights: [out, in]."""
    B, K = x.shape
    N, _ = weight_mu.shape
    in_dtype = x.dtype

    vmem_cap = _vmem_capacity_bytes()
    big_vmem = vmem_cap >= 96 * 1024 * 1024          # v5e/v6e (128 MiB) vs v7x

    # ---- tile sizes ----------------------------------------------------------
    if tm is None:
        if B <= 512:
            tm = _round_up(B, 8)                     # single M tile: weights
        else:                                        # streamed from HBM once
            # Large batch: big M tiles cut weight re-streaming (the dominant
            # HBM term); prefer 512 unless it over-pads the batch badly.
            tm = 512 if _round_up(B, 512) <= int(B * 1.125) + 8 else 256
    Bp = _round_up(B, tm)
    Kp = _round_up(K, 128)
    Np = _round_up(N, 128)

    if tn is None:
        tn = next(t for t in (512, 256, 128) if Np % t == 0)
    if tk is None:
        tk_max = 1024 if big_vmem else 512           # keep v7x (64 MiB) safe
        tk = next(t for t in (tk_max, 512, 256, 128) if Kp % t == 0)

    # v7x megacore: make sure the parallel grid extent is >= 2 so both
    # TensorCores get tiles (no-op cost on single-TC v5e/v6e).
    if (Bp // tm) * (Np // tn) < 2 and Np // 128 >= 2:
        tn = next(t for t in (256, 128) if Np % t == 0 and Np // t >= 2)

    m_tiles, n_tiles, k_tiles = Bp // tm, Np // tn, Kp // tk

    # ---- operand prep (fast path: no copies when already aligned) -----------
    def pad2(a, rows, cols):
        if a.shape == (rows, cols):
            return a                                  # skip the HBM pad copy
        return jnp.zeros((rows, cols), a.dtype).at[:a.shape[0], :a.shape[1]].set(a)

    xf = x.astype(jnp.float32)
    xp = pad2(xf, Bp, Kp)
    wmu = pad2(weight_mu.astype(jnp.float32), Np, Kp)
    wsig = pad2(weight_sigma.astype(jnp.float32), Np, Kp)
    weps = pad2(weight_epsilon.astype(jnp.float32), Np, Kp)

    # Bias is O(N): pre-combine outside the kernel and stream one vector.
    bias = (bias_mu.astype(jnp.float32)
            + bias_sigma.astype(jnp.float32) * bias_epsilon.astype(jnp.float32))
    bias = pad2(bias.reshape(1, N), 1, Np)

    # ---- VMEM budget / compiler params ---------------------------------------
    dsize = 4
    vmem_need = dsize * (3 * 2 * tn * tk      # double-buffered weight streams
                         + 2 * tm * tk        # x
                         + 2 * tm * tn        # resident output/accumulator
                         + 2 * tn)            # bias
    vmem_limit = int(min(max(2 * vmem_need, 32 * 1024 * 1024),
                         int(0.75 * vmem_cap)))

    cost = pl.CostEstimate(
        flops=2 * Bp * Np * Kp + 2 * Np * Kp * m_tiles,
        transcendentals=0,
        bytes_accessed=dsize * (3 * Np * Kp * m_tiles    # weights re-streamed
                                + Bp * Kp * n_tiles      # x re-read per N tile
                                + Bp * Np + Np))

    out = pl.pallas_call(
        noisy_linear_kernel,
        out_shape=jax.ShapeDtypeStruct((Bp, Np), jnp.float32),
        grid_spec=pltpu.PrefetchScalarGridSpec(
            num_scalar_prefetch=0,
            grid=(m_tiles, n_tiles, k_tiles),
            in_specs=[
                pl.BlockSpec((tm, tk), lambda i, j, k: (i, k)),   # x
                pl.BlockSpec((tn, tk), lambda i, j, k: (j, k)),   # weight_mu
                pl.BlockSpec((tn, tk), lambda i, j, k: (j, k)),   # weight_sigma
                pl.BlockSpec((tn, tk), lambda i, j, k: (j, k)),   # weight_epsilon
                pl.BlockSpec((1, tn), lambda i, j, k: (0, j)),    # combined bias
            ],
            out_specs=pl.BlockSpec((tm, tn), lambda i, j, k: (i, j))),
        compiler_params=pltpu.CompilerParams(
            dimension_semantics=("parallel", "parallel", "arbitrary"),
            vmem_limit_bytes=vmem_limit),
        cost_estimate=cost,
    )(xp, wmu, wsig, weps, bias)

    if (Bp, Np) != (B, N):
        out = out[:B, :N]
    return out.astype(in_dtype)


def init_noisy_linear_params(key, in_features, out_features, std_init=0.4):
    """Matches this module's reset_parameters / reset_noise (independent
    element-wise Gaussian noise, exactly as in the given PyTorch spec)."""
    k_wmu, k_bmu, k_weps, k_beps = jax.random.split(key, 4)
    mu_range = 1.0 / jnp.sqrt(jnp.float32(in_features))
    weight_mu = jax.random.uniform(
        k_wmu, (out_features, in_features), jnp.float32, -mu_range, mu_range)
    bias_mu = jax.random.uniform(
        k_bmu, (out_features,), jnp.float32, -mu_range, mu_range)
    weight_sigma = jnp.full((out_features, in_features),
                            std_init / jnp.sqrt(jnp.float32(in_features)),
                            jnp.float32)
    bias_sigma = jnp.full((out_features,),
                          std_init / jnp.sqrt(jnp.float32(out_features)),
                          jnp.float32)
    weight_epsilon = jax.random.normal(
        k_weps, (out_features, in_features), jnp.float32)
    bias_epsilon = jax.random.normal(k_beps, (out_features,), jnp.float32)
    return (weight_mu, weight_sigma, weight_epsilon,
            bias_mu, bias_sigma, bias_epsilon)


if __name__ == "__main__":
    # Small, non-aligned shapes: exercises padding, N tiling and K-accumulation
    # (grid = (1, 3, 3) with tm=8, tn=128, tk=128 after alignment to 384/384).
    B, in_features, out_features = 8, 320, 264
    key = jax.random.PRNGKey(0)
    k_x, k_p = jax.random.split(key)

    x = jax.random.normal(k_x, (B, in_features), jnp.float32)
    (weight_mu, weight_sigma, weight_epsilon,
     bias_mu, bias_sigma, bias_epsilon) = init_noisy_linear_params(
        k_p, in_features, out_features)

    out = noisy_linear(x, weight_mu, weight_sigma, weight_epsilon,
                       bias_mu, bias_sigma, bias_epsilon)
    out = jax.block_until_ready(out)

    # Pure-JAX reference (training-mode path of the PyTorch module).
    w = weight_mu + weight_sigma * weight_epsilon
    b = bias_mu + bias_sigma * bias_epsilon
    ref = jnp.dot(x, w.T, precision=lax.Precision.HIGHEST) + b

    assert out.shape == (B, out_features)
    assert jnp.allclose(out, ref, atol=1e-3, rtol=1e-3), (
        float(jnp.max(jnp.abs(out - ref))))

    # TODO(synk): eval-mode forward (bias_mu + x @ weight_mu.T) is this same
    # kernel with sigma/epsilon zeroed; not exposed as a separate path.
    print("KERNEL_OK")
</pallas_src>

<mosaic_0001>
module attributes {stable_mosaic.version = 11 : i64} {
  func.func @noisy_linear_kernel(%arg0: i32, %arg1: i32, %arg2: i32, %arg3: memref<8x128xf32, #tpu.memory_space<vmem>>, %arg4: memref<128x128xf32, #tpu.memory_space<vmem>>, %arg5: memref<128x128xf32, #tpu.memory_space<vmem>>, %arg6: memref<128x128xf32, #tpu.memory_space<vmem>>, %arg7: memref<1x128xf32, #tpu.memory_space<vmem>>, %arg8: memref<8x128xf32, #tpu.memory_space<vmem>>) attributes {dimension_semantics = [#tpu.dimension_semantics<parallel>, #tpu.dimension_semantics<parallel>, #tpu.dimension_semantics<arbitrary>], iteration_bounds = array<i64: 1, 3, 3>, scalar_prefetch = 0 : i64, scratch_operands = 0 : i64, tpu.core_type = #tpu.core_type<tc>, window_params = [{transform_indices = @transform_0, window_bounds = array<i64: 8, 128>}, {transform_indices = @transform_1, window_bounds = array<i64: 128, 128>}, {transform_indices = @transform_2, window_bounds = array<i64: 128, 128>}, {transform_indices = @transform_3, window_bounds = array<i64: 128, 128>}, {transform_indices = @transform_4, window_bounds = array<i64: 1, 128>}, {transform_indices = @transform_5, window_bounds = array<i64: 8, 128>}]} {
    %c0_i32 = arith.constant 0 : i32
    %0 = arith.cmpi eq, %arg2, %c0_i32 : i32
    %1 = arith.extui %0 : i1 to i32
    %c0_i32_0 = arith.constant 0 : i32
    %2 = arith.cmpi ne, %1, %c0_i32_0 : i32
    scf.if %2 {
      %cst_12 = arith.constant 0.000000e+00 : f32
      %13 = vector.broadcast %cst_12 : f32 to vector<8x128xf32>
      %c0_13 = arith.constant 0 : index
      %c0_14 = arith.constant 0 : index
      %14 = vector.load %arg7[%c0_13, %c0_14] : memref<1x128xf32, #tpu.memory_space<vmem>>, vector<1x128xf32>
      %15 = vector.broadcast %14 : vector<1x128xf32> to vector<8x128xf32>
      %16 = arith.addf %13, %15 : vector<8x128xf32>
      %c0_15 = arith.constant 0 : index
      %c0_16 = arith.constant 0 : index
      %17 = vector.load %arg8[%c0_15, %c0_16] : memref<8x128xf32, #tpu.memory_space<vmem>>, vector<8x128xf32>
      tpu.vector_store %arg8[%c0_15, %c0_16], %16 {strides = array<i32>} : memref<8x128xf32, #tpu.memory_space<vmem>>, vector<8x128xf32>,
    } else {
    }
    %c0 = arith.constant 0 : index
    %c0_1 = arith.constant 0 : index
    %3 = vector.load %arg4[%c0, %c0_1] : memref<128x128xf32, #tpu.memory_space<vmem>>, vector<128x128xf32>
    %c0_2 = arith.constant 0 : index
    %c0_3 = arith.constant 0 : index
    %4 = vector.load %arg5[%c0_2, %c0_3] : memref<128x128xf32, #tpu.memory_space<vmem>>, vector<128x128xf32>
    %c0_4 = arith.constant 0 : index
    %c0_5 = arith.constant 0 : index
    %5 = vector.load %arg6[%c0_4, %c0_5] : memref<128x128xf32, #tpu.memory_space<vmem>>, vector<128x128xf32>
    %6 = arith.mulf %4, %5 : vector<128x128xf32>
    %7 = arith.addf %3, %6 : vector<128x128xf32>
    %c0_6 = arith.constant 0 : index
    %c0_7 = arith.constant 0 : index
    %8 = vector.load %arg8[%c0_6, %c0_7] : memref<8x128xf32, #tpu.memory_space<vmem>>, vector<8x128xf32>
    %c0_8 = arith.constant 0 : index
    %c0_9 = arith.constant 0 : index
    %9 = vector.load %arg3[%c0_8, %c0_9] : memref<8x128xf32, #tpu.memory_space<vmem>>, vector<8x128xf32>
    %cst = arith.constant dense<0.000000e+00> : vector<8x128xf32>
    %10 = tpu.matmul %9, %7, %cst {dimension_numbers = #tpu.dot_dimension_numbers<[1], [1], [0], [0], [0, 0, 1, 0], [], []>} : vector<8x128xf32>, vector<128x128xf32>, vector<8x128xf32> -> vector<8x128xf32>
    %11 = arith.addf %8, %10 : vector<8x128xf32>
    %c0_10 = arith.constant 0 : index
    %c0_11 = arith.constant 0 : index
    %12 = vector.load %arg8[%c0_10, %c0_11] : memref<8x128xf32, #tpu.memory_space<vmem>>, vector<8x128xf32>
    tpu.vector_store %arg8[%c0_10, %c0_11], %11 {strides = array<i32>} : memref<8x128xf32, #tpu.memory_space<vmem>>, vector<8x128xf32>,
    return
  }
  func.func @transform_0(%arg0: i32, %arg1: i32, %arg2: i32) -> (i32, i32) {
    %c0_i32 = arith.constant 0 : i32
    return %arg0, %arg2 : i32, i32
  }
  func.func @transform_1(%arg0: i32, %arg1: i32, %arg2: i32) -> (i32, i32) {
    %c0_i32 = arith.constant 0 : i32
    return %arg1, %arg2 : i32, i32
  }
  func.func @transform_2(%arg0: i32, %arg1: i32, %arg2: i32) -> (i32, i32) {
    %c0_i32 = arith.constant 0 : i32
    return %arg1, %arg2 : i32, i32
  }
  func.func @transform_3(%arg0: i32, %arg1: i32, %arg2: i32) -> (i32, i32) {
    %c0_i32 = arith.constant 0 : i32
    return %arg1, %arg2 : i32, i32
  }
  func.func @transform_4(%arg0: i32, %arg1: i32, %arg2: i32) -> (i32, i32) {
    %c0_i32 = arith.constant 0 : i32
    %c0_i32_0 = arith.constant 0 : i32
    return %c0_i32, %arg1 : i32, i32
  }
  func.func @transform_5(%arg0: i32, %arg1: i32, %arg2: i32) -> (i32, i32) {
    %c0_i32 = arith.constant 0 : i32
    return %arg0, %arg1 : i32, i32
  }
}

</mosaic_0001>

<llo_original>
// kernel: tpu_custom_call.1
$region0: #{tpu_custom_call.1}
  #allocation0 [shape = 'u32[]', space=smem, size = 0x4, offset = 0x4, fixed_abs, tag = 'smem constant byte address 0x4 - core index']
  #allocation1 [shape = 'u32[72,128]{1,0:T(1,128)}', space=vmem, size = 0x9000, scoped, tag = 'internal scratch']
  %s0 = inlined_call_operand.hbm [shape: f32[8,384], index: 0, kind: input, shape index: {}]
  %s1 = inlined_call_operand.hbm [shape: f32[384,384], index: 1, kind: input, shape index: {}]
  %s2 = inlined_call_operand.hbm [shape: f32[384,384], index: 2, kind: input, shape index: {}]
  %s3 = inlined_call_operand.hbm [shape: f32[384,384], index: 3, kind: input, shape index: {}]
  %s4 = inlined_call_operand.vmem [shape: f32[1,384], index: 4, kind: input, shape index: {}]
  %s5 = inlined_call_operand.hbm [shape: f32[8,384], index: 5, kind: output, shape index: {}]
  %s6 = sld [smem:[#allocation0]]
  $region73: #{tpu_custom_call.1} parent=0
    _
  %s8 = ssub.s32 1, %s6
  %s9 = scalar_select 0, %s8, %s6
  $region1: #{tpu_custom_call.1} parent=0
    #allocation2 [shape = 'u8[8192]{0}', space=vmem, size = 0x2000, scoped, tag = 'input window, operand 0']
    #allocation3 [shape = 's32[2]{0}', space=sflag, size = 0x8, scoped, tag = 'scoped memory for tpu_custom_call.1']
    #allocation4 [shape = 's32[2]{0}', space=sflag, size = 0x8, scoped, tag = 'scoped memory for tpu_custom_call.1']
    #allocation5 [shape = 'u8[131072]{0}', space=vmem, size = 0x20000, scoped, tag = 'input window, operand 1']
    #allocation6 [shape = 's32[2]{0}', space=sflag, size = 0x8, scoped, tag = 'scoped memory for tpu_custom_call.1']
    #allocation7 [shape = 'u8[131072]{0}', space=vmem, size = 0x20000, scoped, tag = 'input window, operand 2']
    #allocation8 [shape = 'u8[131072]{0}', space=vmem, size = 0x20000, scoped, tag = 'input window, operand 3']
    #allocation9 [shape = 's32[2]{0}', space=sflag, size = 0x8, scoped, tag = 'scoped memory for tpu_custom_call.1']
    #allocation10 [shape = 'u8[8192]{0}', space=vmem, size = 0x2000, scoped, tag = 'output window, operand 0']
    %10 = vsyncpa [#allocation3], 0
    %s11 = scalar_lea.sflag [#allocation3], 1
    %12 = vsyncpa %s11, 0
    %13 = vsyncpa [#allocation6], 0
    %s14 = scalar_lea.sflag [#allocation6], 1
    %15 = vsyncpa %s14, 0
    %16 = vsyncpa [#allocation9], 0
    %s17 = scalar_lea.sflag [#allocation9], 1
    %18 = vsyncpa %s17, 0
    %19 = vsyncpa [#allocation4], 0
    %s20 = scalar_lea.sflag [#allocation4], 1
    %21 = vsyncpa %s20, 0
    loop: start=0, step=1, limit=11
    $region2: #{tpu_custom_call.1} parent=1 // loop_pre_header
      _
    $region3: #{tpu_custom_call.1} parent=1 // loop_header
      %s23 = sphi 0, %s27
      %p24 = scmp.ge.s32.totalorder %s23, 11
      %s30 = sphi 0, %s49
      %s31 = sphi 0, %s45
      %s32 = sphi 0, %s41
      %s33 = sphi 0, %s30
      %s34 = sphi 0, %s31
      %s35 = sphi 0, %s32
      %s36 = sphi 0, %s33
      %s37 = sphi 0, %s34
      %s38 = sphi 0, %s35
      %s54 = sphi 0, %s56
      %s57 = sphi 0, %s54
      %s58 = sphi 0, %s57
      %s74 = sphi 0, %s58
      %s82 = sphi 0, %s84
      %s85 = sphi 0, %s82
      %s86 = sphi 0, %s85
      %s102 = sphi 0, %s86
      %s110 = sphi 0, %s112
      %s113 = sphi 0, %s110
      %s114 = sphi 0, %s113
      %s130 = sphi 0, %s114
      %s138 = sphi 0, %s140
      %s141 = sphi 0, %s138
      %s142 = sphi 0, %s141
      %s158 = sphi 0, %s142
      %s164 = sphi 0, %s166
      %s167 = sphi 0, %s164
      %s168 = sphi 0, %s167
      %s184 = sphi 0, %s168
      %s192 = sphi 0, %s194
      %s195 = sphi 0, %s192
      %s196 = sphi 0, %s195
      %s212 = sphi 0, %s196
    $region4: #{tpu_custom_call.1} parent=1 // loop_header_branch
      %26 = sbr.rel (%p24) target = $region8
    $region5: #{tpu_custom_call.1} parent=1 // loop_body
      %s28 = ssub.s32 %s23, 1
      %s29 = ssub.s32 %s23, 2
      %s39 = sadd.s32 1, %s32
      %p40 = scmp.ge.s32.totalorder %s39, 3
      %s41 = scalar_select %p40, 0, %s39
      %s42 = sadd.s32 1, %s31
      %s43 = scalar_select %p40, %s42, %s31
      %p44 = scmp.ge.s32.totalorder %s43, 3
      %s45 = scalar_select %p44, 0, %s43
      %s46 = sadd.s32 1, %s30
      %s47 = scalar_select %p44, %s46, %s30
      %p48 = scmp.ge.s32.totalorder %s47, 1
      %s49 = scalar_select %p48, 0, %s47
      %s50 = ssub.s32 %s30, %s49
      %s51 = ssub.s32 %s32, %s41
      %s52 = sor.u32 %s50, %s51
      %p53 = scmp.eq.s32.totalorder %s52, 0
      %s55 = sadd.s32 %s54, 1
      %s56 = scalar_select %p53, %s54, %s55
      %p59 = pneg %p53
      %p60 = scmp.eq.s32.totalorder %s23, 8
      %p61 = por %p59, %p60
      %p62 = scmp.ne.s32.totalorder %s54, %s57
      %p63 = scmp.eq.s32.totalorder %s23, 0
      %p64 = por %p62, %p63
      %p65 = scmp.ne.s32.totalorder %s54, %s57
      %p66 = scmp.eq.s32.totalorder %s28, 8
      %p67 = por %p65, %p66
      %p68 = scmp.ne.s32.totalorder %s57, %s58
      %p69 = scmp.eq.s32.totalorder %s28, 0
      %p70 = por %p68, %p69
      %p71 = scmp.ne.s32.totalorder %s57, %s58
      %p72 = scmp.eq.s32.totalorder %s29, 8
      %p73 = por %p71, %p72
      %p75 = scmp.ne.s32.totalorder %s58, %s74
      %p76 = scmp.eq.s32.totalorder %s29, 0
      %p77 = por %p75, %p76
      %s78 = ssub.s32 %s31, %s45
      %s79 = ssub.s32 %s32, %s41
      %s80 = sor.u32 %s78, %s79
      %p81 = scmp.eq.s32.totalorder %s80, 0
      %s83 = sadd.s32 %s82, 1
      %s84 = scalar_select %p81, %s82, %s83
      %p87 = pneg %p81
      %p88 = scmp.eq.s32.totalorder %s23, 8
      %p89 = por %p87, %p88
      %p90 = scmp.ne.s32.totalorder %s82, %s85
      %p91 = scmp.eq.s32.totalorder %s23, 0
      %p92 = por %p90, %p91
      %p93 = scmp.ne.s32.totalorder %s82, %s85
      %p94 = scmp.eq.s32.totalorder %s28, 8
      %p95 = por %p93, %p94
      %p96 = scmp.ne.s32.totalorder %s85, %s86
      %p97 = scmp.eq.s32.totalorder %s28, 0
      %p98 = por %p96, %p97
      %p99 = scmp.ne.s32.totalorder %s85, %s86
      %p100 = scmp.eq.s32.totalorder %s29, 8
      %p101 = por %p99, %p100
      %p103 = scmp.ne.s32.totalorder %s86, %s102
      %p104 = scmp.eq.s32.totalorder %s29, 0
      %p105 = por %p103, %p104
      %s106 = ssub.s32 %s31, %s45
      %s107 = ssub.s32 %s32, %s41
      %s108 = sor.u32 %s106, %s107
      %p109 = scmp.eq.s32.totalorder %s108, 0
      %s111 = sadd.s32 %s110, 1
      %s112 = scalar_select %p109, %s110, %s111
      %p115 = pneg %p109
      %p116 = scmp.eq.s32.totalorder %s23, 8
      %p117 = por %p115, %p116
      %p118 = scmp.ne.s32.totalorder %s110, %s113
      %p119 = scmp.eq.s32.totalorder %s23, 0
      %p120 = por %p118, %p119
      %p121 = scmp.ne.s32.totalorder %s110, %s113
      %p122 = scmp.eq.s32.totalorder %s28, 8
      %p123 = por %p121, %p122
      %p124 = scmp.ne.s32.totalorder %s113, %s114
      %p125 = scmp.eq.s32.totalorder %s28, 0
      %p126 = por %p124, %p125
      %p127 = scmp.ne.s32.totalorder %s113, %s114
      %p128 = scmp.eq.s32.totalorder %s29, 8
      %p129 = por %p127, %p128
      %p131 = scmp.ne.s32.totalorder %s114, %s130
      %p132 = scmp.eq.s32.totalorder %s29, 0
      %p133 = por %p131, %p132
      %s134 = ssub.s32 %s31, %s45
      %s135 = ssub.s32 %s32, %s41
      %s136 = sor.u32 %s134, %s135
      %p137 = scmp.eq.s32.totalorder %s136, 0
      %s139 = sadd.s32 %s138, 1
      %s140 = scalar_select %p137, %s138, %s139
      %p143 = pneg %p137
      %p144 = scmp.eq.s32.totalorder %s23, 8
      %p145 = por %p143, %p144
      %p146 = scmp.ne.s32.totalorder %s138, %s141
      %p147 = scmp.eq.s32.totalorder %s23, 0
      %p148 = por %p146, %p147
      %p149 = scmp.ne.s32.totalorder %s138, %s141
      %p150 = scmp.eq.s32.totalorder %s28, 8
      %p151 = por %p149, %p150
      %p152 = scmp.ne.s32.totalorder %s141, %s142
      %p153 = scmp.eq.s32.totalorder %s28, 0
      %p154 = por %p152, %p153
      %p155 = scmp.ne.s32.totalorder %s141, %s142
      %p156 = scmp.eq.s32.totalorder %s29, 8
      %p157 = por %p155, %p156
      %p159 = scmp.ne.s32.totalorder %s142, %s158
      %p160 = scmp.eq.s32.totalorder %s29, 0
      %p161 = por %p159, %p160
      %s162 = ssub.s32 %s31, %s45
      %p163 = scmp.eq.s32.totalorder %s162, 0
      %s165 = sadd.s32 %s164, 1
      %s166 = scalar_select %p163, %s164, %s165
      %p169 = pneg %p163
      %p170 = scmp.eq.s32.totalorder %s23, 8
      %p171 = por %p169, %p170
      %p172 = scmp.ne.s32.totalorder %s164, %s167
      %p173 = scmp.eq.s32.totalorder %s23, 0
      %p174 = por %p172, %p173
      %p175 = scmp.ne.s32.totalorder %s164, %s167
      %p176 = scmp.eq.s32.totalorder %s28, 8
      %p177 = por %p175, %p176
      %p178 = scmp.ne.s32.totalorder %s167, %s168
      %p179 = scmp.eq.s32.totalorder %s28, 0
      %p180 = por %p178, %p179
      %p181 = scmp.ne.s32.totalorder %s167, %s168
      %p182 = scmp.eq.s32.totalorder %s29, 8
      %p183 = por %p181, %p182
      %p185 = scmp.ne.s32.totalorder %s168, %s184
      %p186 = scmp.eq.s32.totalorder %s29, 0
      %p187 = por %p185, %p186
      %s188 = ssub.s32 %s30, %s49
      %s189 = ssub.s32 %s31, %s45
      %s190 = sor.u32 %s188, %s189
      %p191 = scmp.eq.s32.totalorder %s190, 0
      %s193 = sadd.s32 %s192, 1
      %s194 = scalar_select %p191, %s192, %s193
      %p197 = pneg %p191
      %p198 = scmp.eq.s32.totalorder %s23, 8
      %p199 = por %p197, %p198
      %p200 = scmp.ne.s32.totalorder %s192, %s195
      %p201 = scmp.eq.s32.totalorder %s23, 0
      %p202 = por %p200, %p201
      %p203 = scmp.ne.s32.totalorder %s192, %s195
      %p204 = scmp.eq.s32.totalorder %s28, 8
      %p205 = por %p203, %p204
      %p206 = scmp.ne.s32.totalorder %s195, %s196
      %p207 = scmp.eq.s32.totalorder %s28, 0
      %p208 = por %p206, %p207
      %p209 = scmp.ne.s32.totalorder %s195, %s196
      %p210 = scmp.eq.s32.totalorder %s29, 8
      %p211 = por %p209, %p210
      %p213 = scmp.ne.s32.totalorder %s196, %s212
      %p214 = scmp.eq.s32.totalorder %s29, 0
      %p215 = por %p213, %p214
      %p216 = scmp.le.s32.totalorder 1, %s23
      %p217 = scmp.lt.s32.totalorder %s23, 10
      %p218 = pnand %p216, %p217
      %p219 = pneg %p218
      // Predicated region
      $region9: #{tpu_custom_call.1} parent=5 // pred_check
        _
      $region10: #{tpu_custom_call.1} parent=5 // pred_check_branch
        %221 = sbr.rel (%p218) target = $region12
      $region11: #{tpu_custom_call.1} parent=5 // pred_region
        %s222 = ssub.s32 %s23, 1
      $region12: #{tpu_custom_call.1} parent=5 // pred_fallthru
        _
      %p223 = scmp.lt.s32.totalorder %s23, 9
      // Predicated region
      $region13: #{tpu_custom_call.1} parent=5 // pred_check
        %p224 = pneg %p223
      $region14: #{tpu_custom_call.1} parent=5 // pred_check_branch
        %226 = sbr.rel (%p224) target = $region16
      $region15: #{tpu_custom_call.1} parent=5 // pred_region
        // Predicated region
        $region17: #{tpu_custom_call.1} parent=15 // pred_check
          %p227 = pneg %p64
        $region18: #{tpu_custom_call.1} parent=15 // pred_check_branch
          %229 = sbr.rel (%p227) target = $region20
        $region19: #{tpu_custom_call.1} parent=15 // pred_region
          %s230 = sand.u32 %s54, 1
          %s231 = scalar_lea.sflag [#allocation3], %s230
          %s232 = sand.u32 %s54, 1
          %s233 = smul.addr %s232, 8
          %s234 = scalar_lea.vmem [#allocation2], %s233
          %236 = vsyncadd %s231, 0
          %s237 = smul.addr %s30, 3
          %s238 = sadd.s32 %s32, %s237
          %s239 = smul.addr %s238, 8
          %s240 = scalar_lea.hbm %s0, %s239
          %s242 = sshll.u32 %s240, 4
          %s243 = int_to_ptr.hbm [resolvable:$true] %s242
          %s244 = sshll.u32 %s234, 4
          %s245 = int_to_ptr.vmem [resolvable:$true] %s244
          %247 = dma.hbm_to_vmem [thread:$0]  %s243, 128, %s245, %s231
        $region20: #{tpu_custom_call.1} parent=15 // pred_fallthru
          _
        // Predicated region
        $region21: #{tpu_custom_call.1} parent=15 // pred_check
          %p248 = pneg %p92
        $region22: #{tpu_custom_call.1} parent=15 // pred_check_branch
          %250 = sbr.rel (%p248) target = $region24
        $region23: #{tpu_custom_call.1} parent=15 // pred_region
          %s251 = sand.u32 %s23, 1
          %s252 = scalar_lea.sflag [#allocation6], %s251
          %s253 = sand.u32 %s82, 1
          %s254 = smul.addr %s253, 128
          %s255 = scalar_lea.vmem [#allocation5], %s254
          %s256 = smul.u32 16, %s31
          %258 = vsyncadd %s252, 0
          %s259 = smul.addr %s256, 3
          %s260 = sadd.s32 %s32, %s259
          %s261 = smul.addr %s260, 8
          %s262 = scalar_lea.hbm %s1, %s261
          %s263 = sshll.u32 %s262, 4
          %s264 = int_to_ptr.hbm [resolvable:$true] %s263
          %s265 = sshll.u32 %s255, 4
          %s266 = int_to_ptr.vmem [resolvable:$true] %s265
          %271 = dma.hbm_to_vmem [thread:$0]  %s264, 2048, %s266, %s252, 384, 128, 8
        $region24: #{tpu_custom_call.1} parent=15 // pred_fallthru
          _
        // Predicated region
        $region25: #{tpu_custom_call.1} parent=15 // pred_check
          %p272 = pneg %p120
        $region26: #{tpu_custom_call.1} parent=15 // pred_check_branch
          %274 = sbr.rel (%p272) target = $region28
        $region27: #{tpu_custom_call.1} parent=15 // pred_region
          %s275 = sand.u32 %s23, 1
          %s276 = scalar_lea.sflag [#allocation6], %s275
          %s277 = sand.u32 %s110, 1
          %s278 = smul.addr %s277, 128
          %s279 = scalar_lea.vmem [#allocation7], %s278
          %s280 = smul.u32 16, %s31
          %282 = vsyncadd %s276, 0
          %s283 = smul.addr %s280, 3
          %s284 = sadd.s32 %s32, %s283
          %s285 = smul.addr %s284, 8
          %s286 = scalar_lea.hbm %s2, %s285
          %s287 = sshll.u32 %s286, 4
          %s288 = int_to_ptr.hbm [resolvable:$true] %s287
          %s289 = sshll.u32 %s279, 4
          %s290 = int_to_ptr.vmem [resolvable:$true] %s289
          %295 = dma.hbm_to_vmem [thread:$0]  %s288, 2048, %s290, %s276, 384, 128, 8
        $region28: #{tpu_custom_call.1} parent=15 // pred_fallthru
          _
        // Predicated region
        $region29: #{tpu_custom_call.1} parent=15 // pred_check
          %p296 = pneg %p148
        $region30: #{tpu_custom_call.1} parent=15 // pred_check_branch
          %298 = sbr.rel (%p296) target = $region32
        $region31: #{tpu_custom_call.1} parent=15 // pred_region
          %s299 = sand.u32 %s138, 1
          %s300 = scalar_lea.sflag [#allocation9], %s299
          %s301 = sand.u32 %s138, 1
          %s302 = smul.addr %s301, 128
          %s303 = scalar_lea.vmem [#allocation8], %s302
          %s304 = smul.u32 16, %s31
          %306 = vsyncadd %s300, 0
          %s307 = smul.addr %s304, 3
          %s308 = sadd.s32 %s32, %s307
          %s309 = smul.addr %s308, 8
          %s310 = scalar_lea.hbm %s3, %s309
          %s311 = sshll.u32 %s310, 4
          %s312 = int_to_ptr.hbm [resolvable:$true] %s311
          %s313 = sshll.u32 %s303, 4
          %s314 = int_to_ptr.vmem [resolvable:$true] %s313
          %319 = dma.hbm_to_vmem [thread:$0]  %s312, 2048, %s314, %s300, 384, 128, 8
        $region32: #{tpu_custom_call.1} parent=15 // pred_fallthru
          _
        // Predicated region
        $region33: #{tpu_custom_call.1} parent=15 // pred_check
          %p320 = pneg %p174
        $region34: #{tpu_custom_call.1} parent=15 // pred_check_branch
          %322 = sbr.rel (%p320) target = $region36
        $region35: #{tpu_custom_call.1} parent=15 // pred_region
          %p323 = scmp.lt.s32.totalorder %s31, 2
          %s324 = scalar_select %p323, %s31, 2
          %s325 = scalar_lea.vmem %s4, %s324
        $region36: #{tpu_custom_call.1} parent=15 // pred_fallthru
          _
      $region16: #{tpu_custom_call.1} parent=5 // pred_fallthru
        _
      %p326 = scmp.le.s32.totalorder 1, %s23
      %p327 = scmp.lt.s32.totalorder %s23, 10
      %p328 = pnand %p326, %p327
      %p329 = pneg %p328
      // Predicated region
      $region37: #{tpu_custom_call.1} parent=5 // pred_check
        _
      $region38: #{tpu_custom_call.1} parent=5 // pred_check_branch
        %331 = sbr.rel (%p328) target = $region40
      $region39: #{tpu_custom_call.1} parent=5 // pred_region
        %s332 = ssub.s32 %s23, 1
        %s333 = sand.u32 %s57, 1
        %s334 = scalar_lea.sflag [#allocation3], %s333
        %s335 = sand.u32 %s57, 1
        %s336 = smul.addr %s335, 8
        %s337 = scalar_lea.vmem [#allocation2], %s336
        // Predicated region
        $region41: #{tpu_custom_call.1} parent=39 // pred_check
          %p338 = pneg %p70
        $region42: #{tpu_custom_call.1} parent=39 // pred_check_branch
          %340 = sbr.rel (%p338) target = $region44
        $region43: #{tpu_custom_call.1} parent=39 // pred_region
          %342 = dma.done %s334, 128
        $region44: #{tpu_custom_call.1} parent=39 // pred_fallthru
          _
        %s343 = sand.u32 %s28, 1
        %s344 = scalar_lea.sflag [#allocation6], %s343
        %s345 = sand.u32 %s85, 1
        %s346 = smul.addr %s345, 128
        %s347 = scalar_lea.vmem [#allocation5], %s346
        // Predicated region
        $region45: #{tpu_custom_call.1} parent=39 // pred_check
          %p348 = pneg %p98
        $region46: #{tpu_custom_call.1} parent=39 // pred_check_branch
          %350 = sbr.rel (%p348) target = $region48
        $region47: #{tpu_custom_call.1} parent=39 // pred_region
          %352 = dma.done %s344, 2048
        $region48: #{tpu_custom_call.1} parent=39 // pred_fallthru
          _
        %s353 = sand.u32 %s28, 1
        %s354 = scalar_lea.sflag [#allocation6], %s353
        %s355 = sand.u32 %s113, 1
        %s356 = smul.addr %s355, 128
        %s357 = scalar_lea.vmem [#allocation7], %s356
        // Predicated region
        $region49: #{tpu_custom_call.1} parent=39 // pred_check
          %p358 = pneg %p126
        $region50: #{tpu_custom_call.1} parent=39 // pred_check_branch
          %360 = sbr.rel (%p358) target = $region52
        $region51: #{tpu_custom_call.1} parent=39 // pred_region
          %362 = dma.done %s354, 2048
        $region52: #{tpu_custom_call.1} parent=39 // pred_fallthru
          _
        %s363 = sand.u32 %s141, 1
        %s364 = scalar_lea.sflag [#allocation9], %s363
        %s365 = sand.u32 %s141, 1
        %s366 = smul.addr %s365, 128
        %s367 = scalar_lea.vmem [#allocation8], %s366
        // Predicated region
        $region53: #{tpu_custom_call.1} parent=39 // pred_check
          %p368 = pneg %p154
        $region54: #{tpu_custom_call.1} parent=39 // pred_check_branch
          %370 = sbr.rel (%p368) target = $region56
        $region55: #{tpu_custom_call.1} parent=39 // pred_region
          %372 = dma.done %s364, 2048
        $region56: #{tpu_custom_call.1} parent=39 // pred_fallthru
          _
        %s373 = sand.u32 %s57, 1
        %s374 = scalar_lea.sflag [#allocation3], %s373
        %s375 = sand.u32 %s57, 1
        %s376 = smul.addr %s375, 8
        %s377 = scalar_lea.vmem [#allocation2], %s376
        %p378 = pneg %p70
        %p379 = pneg %p67
        %s380 = sand.u32 %s28, 1
        %s381 = scalar_lea.sflag [#allocation6], %s380
        %s382 = sand.u32 %s85, 1
        %s383 = smul.addr %s382, 128
        %s384 = scalar_lea.vmem [#allocation5], %s383
        %p385 = pneg %p98
        %p386 = pneg %p95
        %s387 = sand.u32 %s28, 1
        %s388 = scalar_lea.sflag [#allocation6], %s387
        %s389 = sand.u32 %s113, 1
        %s390 = smul.addr %s389, 128
        %s391 = scalar_lea.vmem [#allocation7], %s390
        %p392 = pneg %p126
        %p393 = pneg %p123
        %s394 = sand.u32 %s141, 1
        %s395 = scalar_lea.sflag [#allocation9], %s394
        %s396 = sand.u32 %s141, 1
        %s397 = smul.addr %s396, 128
        %s398 = scalar_lea.vmem [#allocation8], %s397
        %p399 = pneg %p154
        %p400 = pneg %p151
        %p401 = scmp.lt.s32.totalorder %s34, 2
        %s402 = scalar_select %p401, %s34, 2
        %s403 = scalar_lea.vmem %s4, %s402
        %p404 = pneg %p180
        %p405 = pneg %p177
        %p406 = pneg %p208
        %p407 = pneg %p205
        %s408 = sand.u32 %s195, 1
        %s409 = scalar_lea.sflag [#allocation4], %s408
        %s410 = sand.u32 %s195, 1
        %s411 = smul.addr %s410, 8
        %s412 = scalar_lea.vmem [#allocation10], %s411
        %s413 = smul.u32 16, %s34
        %s414 = smul.u32 16, %s34
        %s415 = smul.u32 16, %s34
        %p416 = scmp.lt.s32.totalorder %s34, 2
        %s417 = scalar_select %p416, %s34, 2
        %s418 = scalar_lea.vmem %s4, %s417
        %p419 = scmp.eq.s32.totalorder %s35, 0
        // Predicated region
        $region57: #{tpu_custom_call.1} parent=39 // pred_check
          %p420 = pneg %p419
        $region58: #{tpu_custom_call.1} parent=39 // pred_check_branch
          %422 = sbr.rel (%p420) target = $region60
        $region59: #{tpu_custom_call.1} parent=39 // pred_region
          %v423 = vld [vmem:[%s418] sm:$0x1]
          %v425 = vperm.slane %v423, 0
          %v427 = vadd.f32 %v425, 0.0
          %428 = vst [vmem:[%s412] sm:$0xff] %v427
        $region60: #{tpu_custom_call.1} parent=39 // pred_fallthru
          _
        %v429 = vld [vmem:[%s347] sm:$0xff]
        %v430 = vld [vmem:[%s347 + $0x8] sm:$0xff]
        %v431 = vld [vmem:[%s347 + $0x10] sm:$0xff]
        %v432 = vld [vmem:[%s347 + $0x18] sm:$0xff]
        %v433 = vld [vmem:[%s347 + $0x20] sm:$0xff]
        %v434 = vld [vmem:[%s347 + $0x28] sm:$0xff]
        %v435 = vld [vmem:[%s347 + $0x30] sm:$0xff]
        %v436 = vld [vmem:[%s347 + $0x38] sm:$0xff]
        %v437 = vld [vmem:[%s347 + $0x40] sm:$0xff]
        %v438 = vld [vmem:[%s347 + $0x48] sm:$0xff]
        %v439 = vld [vmem:[%s347 + $0x50] sm:$0xff]
        %v440 = vld [vmem:[%s347 + $0x58] sm:$0xff]
        %v441 = vld [vmem:[%s347 + $0x60] sm:$0xff]
        %v442 = vld [vmem:[%s347 + $0x68] sm:$0xff]
        %v443 = vld [vmem:[%s347 + $0x70] sm:$0xff]
        %v444 = vld [vmem:[%s347 + $0x78] sm:$0xff]
        %v445 = vld [vmem:[%s357] sm:$0xff]
        %v446 = vld [vmem:[%s357 + $0x8] sm:$0xff]
        %v447 = vld [vmem:[%s357 + $0x10] sm:$0xff]
        %v448 = vld [vmem:[%s357 + $0x18] sm:$0xff]
        %v449 = vld [vmem:[%s357 + $0x20] sm:$0xff]
        %v450 = vld [vmem:[%s357 + $0x28] sm:$0xff]
        %v451 = vld [vmem:[%s357 + $0x30] sm:$0xff]
        %v452 = vld [vmem:[%s357 + $0x38] sm:$0xff]
        %v453 = vld [vmem:[%s357 + $0x40] sm:$0xff]
        %v454 = vld [vmem:[%s357 + $0x48] sm:$0xff]
        %v455 = vld [vmem:[%s357 + $0x50] sm:$0xff]
        %v456 = vld [vmem:[%s357 + $0x58] sm:$0xff]
        %v457 = vld [vmem:[%s357 + $0x60] sm:$0xff]
        %v458 = vld [vmem:[%s357 + $0x68] sm:$0xff]
        %v459 = vld [vmem:[%s357 + $0x70] sm:$0xff]
        %v460 = vld [vmem:[%s357 + $0x78] sm:$0xff]
        %v461 = vld [vmem:[%s367] sm:$0xff]
        %v462 = vld [vmem:[%s367 + $0x8] sm:$0xff]
        %v463 = vld [vmem:[%s367 + $0x10] sm:$0xff]
        %v464 = vld [vmem:[%s367 + $0x18] sm:$0xff]
        %v465 = vld [vmem:[%s367 + $0x20] sm:$0xff]
        %v466 = vld [vmem:[%s367 + $0x28] sm:$0xff]
        %v467 = vld [vmem:[%s367 + $0x30] sm:$0xff]
        %v468 = vld [vmem:[%s367 + $0x38] sm:$0xff]
        %v469 = vld [vmem:[%s367 + $0x40] sm:$0xff]
        %v470 = vld [vmem:[%s367 + $0x48] sm:$0xff]
        %v471 = vld [vmem:[%s367 + $0x50] sm:$0xff]
        %v472 = vld [vmem:[%s367 + $0x58] sm:$0xff]
        %v473 = vld [vmem:[%s367 + $0x60] sm:$0xff]
        %v474 = vld [vmem:[%s367 + $0x68] sm:$0xff]
        %v475 = vld [vmem:[%s367 + $0x70] sm:$0xff]
        %v476 = vld [vmem:[%s367 + $0x78] sm:$0xff]
        %v477 = vmul.f32 %v445, %v461
        %v478 = vmul.f32 %v446, %v462
        %v479 = vmul.f32 %v447, %v463
        %v480 = vmul.f32 %v448, %v464
        %v481 = vmul.f32 %v449, %v465
        %v482 = vmul.f32 %v450, %v466
        %v483 = vmul.f32 %v451, %v467
        %v484 = vmul.f32 %v452, %v468
        %v485 = vmul.f32 %v453, %v469
        %v486 = vmul.f32 %v454, %v470
        %v487 = vmul.f32 %v455, %v471
        %v488 = vmul.f32 %v456, %v472
        %v489 = vmul.f32 %v457, %v473
        %v490 = vmul.f32 %v458, %v474
        %v491 = vmul.f32 %v459, %v475
        %v492 = vmul.f32 %v460, %v476
        %v493 = vadd.f32 %v429, %v477
        %v494 = vadd.f32 %v430, %v478
        %v495 = vadd.f32 %v431, %v479
        %v496 = vadd.f32 %v432, %v480
        %v497 = vadd.f32 %v433, %v481
        %v498 = vadd.f32 %v434, %v482
        %v499 = vadd.f32 %v435, %v483
        %v500 = vadd.f32 %v436, %v484
        %v501 = vadd.f32 %v437, %v485
        %v502 = vadd.f32 %v438, %v486
        %v503 = vadd.f32 %v439, %v487
        %v504 = vadd.f32 %v440, %v488
        %v505 = vadd.f32 %v441, %v489
        %v506 = vadd.f32 %v442, %v490
        %v507 = vadd.f32 %v443, %v491
        %v508 = vadd.f32 %v444, %v492
        %v509 = vld [vmem:[%s412] sm:$0xff]
        %v510 = vld [vmem:[%s337] sm:$0xff]
        %511 = vmatpush.xpose.msra.mxu0 %v508
        %512 = vmatpush.xpose.msra.mxu0 %v507
        %513 = vmatpush.xpose.msra.mxu0 %v506
        %514 = vmatpush.xpose.msra.mxu0 %v505
        %515 = vmatpush.xpose.msra.mxu0 %v504
        %516 = vmatpush.xpose.msra.mxu0 %v503
        %517 = vmatpush.xpose.msra.mxu0 %v502
        %518 = vmatpush.xpose.msra.mxu0 %v501
        %519 = vmatpush.xpose.msra.mxu0 %v500
        %520 = vmatpush.xpose.msra.mxu0 %v499
        %521 = vmatpush.xpose.msra.mxu0 %v498
        %522 = vmatpush.xpose.msra.mxu0 %v497
        %523 = vmatpush.xpose.msra.mxu0 %v496
        %524 = vmatpush.xpose.msra.mxu0 %v495
        %525 = vmatpush.xpose.msra.mxu0 %v494
        %526 = vmatpush.xpose.msra.mxu0 %v493
        %527 = vmatmul.f32.gmra.mxu0 %v510
        %v528 = vpop.f32.mrf.mxu0
        %v529 = vadd.f32 0.0, %v528
        %530 = vdwg.mxu0
        %v531 = vadd.f32 %v509, %v529
        %532 = vst [vmem:[%s412] sm:$0xff] %v531
        %s533 = sand.u32 %s195, 1
        %s534 = scalar_lea.sflag [#allocation4], %s533
        %s535 = sand.u32 %s195, 1
        %s536 = smul.addr %s535, 8
        %s537 = scalar_lea.vmem [#allocation10], %s536
        // Predicated region
        $region61: #{tpu_custom_call.1} parent=39 // pred_check
          %p538 = pneg %p205
        $region62: #{tpu_custom_call.1} parent=39 // pred_check_branch
          %540 = sbr.rel (%p538) target = $region64
        $region63: #{tpu_custom_call.1} parent=39 // pred_region
          %542 = vsyncadd %s534, 0
          %s543 = smul.addr %s33, 3
          %s544 = sadd.s32 %s34, %s543
          %s545 = smul.addr %s544, 8
          %s546 = scalar_lea.hbm %s5, %s545
          %s548 = sshll.u32 %s537, 4
          %s549 = int_to_ptr.vmem [resolvable:$true] %s548
          %s550 = sshll.u32 %s546, 4
          %s551 = int_to_ptr.hbm [resolvable:$true] %s550
          %553 = dma.vmem_to_hbm [thread:$0]  %s549, 128, %s551, %s534
        $region64: #{tpu_custom_call.1} parent=39 // pred_fallthru
          _
      $region40: #{tpu_custom_call.1} parent=5 // pred_fallthru
        _
      %p554 = scmp.le.s32.totalorder 2, %s23
      // Predicated region
      $region65: #{tpu_custom_call.1} parent=5 // pred_check
        %p555 = pneg %p554
      $region66: #{tpu_custom_call.1} parent=5 // pred_check_branch
        %557 = sbr.rel (%p555) target = $region68
      $region67: #{tpu_custom_call.1} parent=5 // pred_region
        %s558 = ssub.s32 %s23, 2
        // Predicated region
        $region69: #{tpu_custom_call.1} parent=67 // pred_check
          %p559 = pneg %p211
        $region70: #{tpu_custom_call.1} parent=67 // pred_check_branch
          %561 = sbr.rel (%p559) target = $region72
        $region71: #{tpu_custom_call.1} parent=67 // pred_region
          %s562 = sand.u32 %s196, 1
          %s563 = scalar_lea.sflag [#allocation4], %s562
          %s564 = sand.u32 %s196, 1
          %s565 = smul.addr %s564, 8
          %s566 = scalar_lea.vmem [#allocation10], %s565
          %568 = dma.done %s563, 128
        $region72: #{tpu_custom_call.1} parent=67 // pred_fallthru
          _
      $region68: #{tpu_custom_call.1} parent=5 // pred_fallthru
        _
    $region6: #{tpu_custom_call.1} parent=1 // loop_footer
      %s27 = sadd.s32 1, %s23
    $region7: #{tpu_custom_call.1} parent=1 // loop_footer_branch
      %22 = sbr.rel target = $region3
    $region8: #{tpu_custom_call.1} parent=1 // loop_exit
      _
    %569 = vsyncpa [#allocation3], 1
    %s570 = scalar_lea.sflag [#allocation3], 1
    %571 = vsyncpa %s570, 1
    %572 = vsyncpa [#allocation6], 1
    %s573 = scalar_lea.sflag [#allocation6], 1
    %574 = vsyncpa %s573, 1
    %575 = vsyncpa [#allocation9], 1
    %s576 = scalar_lea.sflag [#allocation9], 1
    %577 = vsyncpa %s576, 1
    %578 = vsyncpa [#allocation4], 1
    %s579 = scalar_lea.sflag [#allocation4], 1
    %580 = vsyncpa %s579, 1

</llo_original>
